<compile_context>
chip_gen: v7x
topology: tpu7x:2x2x1
jax: 0.10.0
libtpu: 0.0.40
codegen_flags: <defaults>
</compile_context>

<pallas_src>
import functools

import jax
import jax.numpy as jnp
from jax import lax
from jax.experimental import pallas as pl
from jax.experimental.pallas import tpu as pltpu


# ----------------------------------------------------------------------------
# Kernel bodies
# ----------------------------------------------------------------------------
def _gat_heads(xs_ref, xd_ref, w_ref, asrc_ref, adstm_ref, colmask_ref,
               adj_ref, *, heads, f_out):
    """Multi-head GAT attention for one destination-row tile.

    Returns a dense f32 slab [TM, heads*f_out] where head h occupies lanes
    [h*f_out, (h+1)*f_out).
    """
    tm = adj_ref.shape[0]
    hf = heads * f_out

    # Feature transform on the MXU: bf16 operands, f32 accumulation.
    w16 = w_ref[...].astype(jnp.bfloat16)
    xw_src = jnp.dot(xs_ref[...].astype(jnp.bfloat16), w16,
                     preferred_element_type=jnp.float32)           # [N, H*F']
    xw_dst = jnp.dot(xd_ref[...].astype(jnp.bfloat16), w16,
                     preferred_element_type=jnp.float32)           # [TM, H*F']
    xw_src16 = xw_src.astype(jnp.bfloat16)

    # All-head attention logits in two small matmuls (no per-head lane
    # slicing, no transposes). asrc_ref is [Hpad, H*F'] block-structured, so
    # the source logits come out already as rows: a_src_rows[h, j].
    a_src_rows = lax.dot_general(
        asrc_ref[...], xw_src, (((1,), (1,)), ((), ())),
        preferred_element_type=jnp.float32)                        # [Hpad, N]
    a_dst = jnp.dot(xw_dst, adstm_ref[...],
                    preferred_element_type=jnp.float32)            # [TM, H]

    # Hoisted edge mask: int8 adjacency -> f32 compare, once for all heads.
    edge = adj_ref[...].astype(jnp.float32) > 0.0                  # [TM, N]
    neg = jnp.float32(-1e30)
    colmask = colmask_ref[...]                                     # [H, H*F']

    acc = jnp.zeros((tm, hf), jnp.float32)
    for h in range(heads):                                         # unrolled, H small
        # e[i, j] = leaky_relu(a_src[j] + a_dst[i], 0.2), masked softmax row-wise.
        e = a_dst[:, h:h + 1] + a_src_rows[h:h + 1, :]             # [TM, N]
        e = jnp.where(e > 0, e, 0.2 * e)
        e = jnp.where(edge, e, neg)
        e = e - jnp.max(e, axis=-1, keepdims=True)
        p = jnp.exp(e)
        alpha = p * pl.reciprocal(jnp.sum(p, axis=-1, keepdims=True), approx=True)
        # Aggregate against the full xw slab (same MXU cost as the 8-lane
        # slice) and keep only head h's lanes -> no lane relayout, no concat.
        m = jnp.dot(alpha.astype(jnp.bfloat16), xw_src16,
                    preferred_element_type=jnp.float32)            # [TM, H*F']
        acc = acc + m * colmask[h:h + 1, :]
    return acc


def _elu(y):
    # exp argument clamped to <= 0 so no inf is ever produced.
    return jnp.where(y > 0, y, jnp.exp(jnp.minimum(y, 0.0)) - 1.0)


def _gat_concat_kernel(xs_ref, xd_ref, w_ref, asrc_ref, adstm_ref, colmask_ref,
                       bias_ref, scale_ref, shift_ref, adj_ref, out_ref,
                       *, heads, f_out):
    """GATConv(concat=True) + bias + BatchNorm(eval) + ELU for one row tile."""
    y = _gat_heads(xs_ref, xd_ref, w_ref, asrc_ref, adstm_ref, colmask_ref,
                   adj_ref, heads=heads, f_out=f_out)              # [TM, H*F']
    y = y + bias_ref[...]
    y = y * scale_ref[...] + shift_ref[...]
    out_ref[...] = _elu(y)


def _gat_mean_kernel(xs_ref, xd_ref, w_ref, asrc_ref, adstm_ref, colmask_ref,
                     bias_ref, scale_ref, shift_ref, adj_ref, fold_ref,
                     *rest, heads, f_out, temporal):
    """GATConv(concat=False) + bias + BN(eval) + ELU [+ temporal scale]."""
    if temporal:
        t_ref, tw1_ref, tb1_ref, tw2_ref, tb2_ref, out_ref = rest
    else:
        (out_ref,) = rest

    s = _gat_heads(xs_ref, xd_ref, w_ref, asrc_ref, adstm_ref, colmask_ref,
                   adj_ref, heads=heads, f_out=f_out)              # [TM, H*F']
    # Mean over heads via a tiny fold matmul (no per-head lane slices).
    y = jnp.dot(s, fold_ref[...], preferred_element_type=jnp.float32)  # [TM, F']
    y = y + bias_ref[...]
    y = y * scale_ref[...] + shift_ref[...]
    y = _elu(y)

    if temporal:
        # temporal_attention MLP fused into the epilogue; the Linear(1, F')
        # is a broadcast multiply, not a K=1 matmul.
        t = t_ref[...]                                             # [TM, 1]
        h1 = jnp.maximum(t * tw1_ref[...] + tb1_ref[...], 0.0)     # [TM, F']
        logit = jnp.sum(h1 * tw2_ref[...], axis=-1, keepdims=True) + tb2_ref[...]
        y = y * (1.0 / (1.0 + jnp.exp(-logit)))                    # sigmoid gate
    out_ref[...] = y


# ----------------------------------------------------------------------------
# pallas_call wrappers
# ----------------------------------------------------------------------------
def _full_spec(a):
    """Whole-array VMEM-resident spec (same block for every grid step)."""
    return pl.BlockSpec(a.shape, lambda i, _n=a.ndim: (0,) * _n)


def _compiler_params():
    return pltpu.CompilerParams(
        dimension_semantics=("parallel",),        # dst-row tiles are independent
        vmem_limit_bytes=48 * 1024 * 1024)        # fits v7x's 64 MiB VMEM


def gat_layer_concat(x, w, asrc_blk, adst_mat, colmask, bias, bn_scale,
                     bn_shift, adj_i8, *, heads, f_out, tm):
    n = x.shape[0]
    out_dim = heads * f_out
    kernel = functools.partial(_gat_concat_kernel, heads=heads, f_out=f_out)
    return pl.pallas_call(
        kernel,
        out_shape=jax.ShapeDtypeStruct((n, out_dim), jnp.float32),
        grid=(n // tm,),
        in_specs=[
            _full_spec(x),                                     # all source nodes
            pl.BlockSpec((tm, x.shape[1]), lambda i: (i, 0)),  # dst-row tile of x
            _full_spec(w), _full_spec(asrc_blk), _full_spec(adst_mat),
            _full_spec(colmask), _full_spec(bias), _full_spec(bn_scale),
            _full_spec(bn_shift),
            pl.BlockSpec((tm, n), lambda i: (i, 0)),           # adj row tile (int8)
        ],
        out_specs=pl.BlockSpec((tm, out_dim), lambda i: (i, 0)),
        compiler_params=_compiler_params(),
    )(x, x, w, asrc_blk, adst_mat, colmask, bias, bn_scale, bn_shift, adj_i8)


def gat_layer_mean(x, w, asrc_blk, adst_mat, colmask, fold, bias, bn_scale,
                   bn_shift, adj_i8, temporal_inputs, *, heads, f_out, tm):
    n = x.shape[0]
    temporal = temporal_inputs is not None
    kernel = functools.partial(_gat_mean_kernel, heads=heads, f_out=f_out,
                               temporal=temporal)
    in_specs = [
        _full_spec(x),
        pl.BlockSpec((tm, x.shape[1]), lambda i: (i, 0)),
        _full_spec(w), _full_spec(asrc_blk), _full_spec(adst_mat),
        _full_spec(colmask), _full_spec(bias), _full_spec(bn_scale),
        _full_spec(bn_shift),
        pl.BlockSpec((tm, n), lambda i: (i, 0)),
        _full_spec(fold),
    ]
    args = [x, x, w, asrc_blk, adst_mat, colmask, bias, bn_scale, bn_shift,
            adj_i8, fold]
    if temporal:
        t, tw1, tb1, tw2, tb2 = temporal_inputs
        in_specs += [pl.BlockSpec((tm, 1), lambda i: (i, 0)),
                     _full_spec(tw1), _full_spec(tb1),
                     _full_spec(tw2), _full_spec(tb2)]
        args += [t, tw1, tb1, tw2, tb2]
    return pl.pallas_call(
        kernel,
        out_shape=jax.ShapeDtypeStruct((n, f_out), jnp.float32),
        grid=(n // tm,),
        in_specs=in_specs,
        out_specs=pl.BlockSpec((tm, f_out), lambda i: (i, 0)),
        compiler_params=_compiler_params(),
    )(*args)


# ----------------------------------------------------------------------------
# Model-level wrapper
# ----------------------------------------------------------------------------
def _expand_heads(att, heads, f_out):
    """[H, F'] -> block matrix [H, H*F'] with att[h] on head h's columns."""
    eye = jnp.eye(heads, dtype=jnp.float32)
    return jnp.einsum('hg,hf->hgf', eye, att).reshape(heads, heads * f_out)


def _pad_rows(a, mult=8):
    pad = (-a.shape[0]) % mult
    if pad:
        a = jnp.concatenate([a, jnp.zeros((pad, a.shape[1]), a.dtype)], axis=0)
    return a


def temporal_gat_forward(params, x, edge_index, edge_time=None):
    """Eval-mode forward of TemporalGAT.

    x: [N, node_features], edge_index: [2, E] int32 (row 0 = src, row 1 = dst),
    edge_time: [N] (PyTorch broadcast `x * time_weights` requires len == N).
    """
    n = x.shape[0]
    heads, f_out = params["heads"], params["f_out"]

    # Dense adjacency mask adj[dst, src] = 1, plus self loops (GATConv default),
    # stored as int8 to quarter the HBM traffic of the [N, N] mask.
    src, dst = edge_index[0], edge_index[1]
    adj = jnp.zeros((n, n), jnp.float32).at[dst, src].set(1.0)
    idx = jnp.arange(n)
    adj = adj.at[idx, idx].set(1.0)
    adj_i8 = adj.astype(jnp.int8)

    # Destination-row tile size (multiple of 8/32; full N for small graphs).
    tm = n if n <= 256 else 256
    assert n % tm == 0, "pad N to a multiple of 256 for larger graphs"

    # Block-structured attention matrices (built once, tiny).
    colmask = _expand_heads(jnp.ones((heads, f_out), jnp.float32), heads, f_out)
    fold = jnp.tile(jnp.eye(f_out, dtype=jnp.float32), (heads, 1)) / heads
    asrc1 = _pad_rows(_expand_heads(params["asrc1"], heads, f_out))
    adst1 = _expand_heads(params["adst1"], heads, f_out).T          # [H*F', H]
    asrc2 = _pad_rows(_expand_heads(params["asrc2"], heads, f_out))
    adst2 = _expand_heads(params["adst2"], heads, f_out).T

    x = x.astype(jnp.float32)
    # F.dropout(x, training=False) is identity.
    h = gat_layer_concat(x, params["w1"], asrc1, adst1, colmask,
                         params["bias1"], params["bn1_scale"], params["bn1_shift"],
                         adj_i8, heads=heads, f_out=f_out, tm=tm)

    temporal_inputs = None
    if edge_time is not None:
        t = edge_time.reshape(n, 1).astype(jnp.float32)
        temporal_inputs = (t, params["tw1"], params["tb1"],
                           params["tw2"], params["tb2"])
    h = gat_layer_mean(h, params["w2"], asrc2, adst2, colmask, fold,
                       params["bias2"], params["bn2_scale"], params["bn2_shift"],
                       adj_i8, temporal_inputs, heads=heads, f_out=f_out, tm=tm)
    return h


def init_params(key, node_features, hidden_channels, num_heads):
    f_out = hidden_channels // num_heads
    ks = jax.random.split(key, 12)
    u = lambda k, shape, s=0.2: jax.random.uniform(k, shape, jnp.float32, -s, s)
    eps = 1e-5
    # BatchNorm1d eval with default stats: gamma=1, beta=0, mean=0, var=1.
    bn_scale1 = jnp.full((1, hidden_channels), 1.0 / jnp.sqrt(1.0 + eps), jnp.float32)
    bn_shift1 = jnp.zeros((1, hidden_channels), jnp.float32)
    bn_scale2 = jnp.full((1, f_out), 1.0 / jnp.sqrt(1.0 + eps), jnp.float32)
    bn_shift2 = jnp.zeros((1, f_out), jnp.float32)
    return dict(
        heads=num_heads, f_out=f_out,
        # GATConv 1 (concat=True)
        w1=u(ks[0], (node_features, num_heads * f_out)),
        asrc1=u(ks[1], (num_heads, f_out)),
        adst1=u(ks[2], (num_heads, f_out)),
        bias1=jnp.zeros((1, num_heads * f_out), jnp.float32),
        bn1_scale=bn_scale1, bn1_shift=bn_shift1,
        # GATConv 2 (concat=False)
        w2=u(ks[3], (hidden_channels, num_heads * f_out)),
        asrc2=u(ks[4], (num_heads, f_out)),
        adst2=u(ks[5], (num_heads, f_out)),
        bias2=jnp.zeros((1, f_out), jnp.float32),
        bn2_scale=bn_scale2, bn2_shift=bn_shift2,
        # temporal_attention: Linear(1, F') -> ReLU -> Linear(F', 1) -> Sigmoid
        tw1=u(ks[6], (1, f_out), 1.0),
        tb1=u(ks[7], (1, f_out), 1.0),
        tw2=u(ks[8], (1, f_out), 0.5),
        tb2=u(ks[9], (1, 1), 0.5),
    )


if __name__ == "__main__":
    key = jax.random.PRNGKey(0)
    N, F_IN, HIDDEN, HEADS, E = 16, 8, 32, 4, 48

    k_x, k_e, k_t, k_p = jax.random.split(key, 4)
    x = jax.random.normal(k_x, (N, F_IN), jnp.float32)
    edge_index = jax.random.randint(k_e, (2, E), 0, N, jnp.int32)
    # NOTE: the PyTorch broadcast `x * time_weights` requires len(edge_time) == N.
    edge_time = jax.random.uniform(k_t, (N,), jnp.float32)

    params = init_params(k_p, F_IN, HIDDEN, HEADS)

    out = jax.block_until_ready(temporal_gat_forward(params, x, edge_index, edge_time))
    assert out.shape == (N, HIDDEN // HEADS)
    assert bool(jnp.all(jnp.isfinite(out)))
    print("KERNEL_OK")
</pallas_src>

<mosaic_0001>
module attributes {stable_mosaic.version = 11 : i64} {
  func.func @_gat_concat_kernel(%arg0: i32, %arg1: memref<16x8xf32, #tpu.memory_space<vmem>>, %arg2: memref<16x8xf32, #tpu.memory_space<vmem>>, %arg3: memref<8x32xf32, #tpu.memory_space<vmem>>, %arg4: memref<8x32xf32, #tpu.memory_space<vmem>>, %arg5: memref<32x4xf32, #tpu.memory_space<vmem>>, %arg6: memref<4x32xf32, #tpu.memory_space<vmem>>, %arg7: memref<1x32xf32, #tpu.memory_space<vmem>>, %arg8: memref<1x32xf32, #tpu.memory_space<vmem>>, %arg9: memref<1x32xf32, #tpu.memory_space<vmem>>, %arg10: memref<16x16xi8, #tpu.memory_space<vmem>>, %arg11: memref<16x32xf32, #tpu.memory_space<vmem>>) attributes {dimension_semantics = [#tpu.dimension_semantics<parallel>], iteration_bounds = array<i64: 1>, scalar_prefetch = 0 : i64, scratch_operands = 0 : i64, tpu.core_type = #tpu.core_type<tc>, window_params = [{pipeline_mode = #tpu.pipeline_mode<synchronous>, transform_indices = @transform_0, window_bounds = array<i64: 16, 8>}, {transform_indices = @transform_1, window_bounds = array<i64: 16, 8>}, {pipeline_mode = #tpu.pipeline_mode<synchronous>, transform_indices = @transform_2, window_bounds = array<i64: 8, 32>}, {pipeline_mode = #tpu.pipeline_mode<synchronous>, transform_indices = @transform_3, window_bounds = array<i64: 8, 32>}, {pipeline_mode = #tpu.pipeline_mode<synchronous>, transform_indices = @transform_4, window_bounds = array<i64: 32, 4>}, {pipeline_mode = #tpu.pipeline_mode<synchronous>, transform_indices = @transform_5, window_bounds = array<i64: 4, 32>}, {pipeline_mode = #tpu.pipeline_mode<synchronous>, transform_indices = @transform_6, window_bounds = array<i64: 1, 32>}, {pipeline_mode = #tpu.pipeline_mode<synchronous>, transform_indices = @transform_7, window_bounds = array<i64: 1, 32>}, {pipeline_mode = #tpu.pipeline_mode<synchronous>, transform_indices = @transform_8, window_bounds = array<i64: 1, 32>}, {transform_indices = @transform_9, window_bounds = array<i64: 16, 16>}, {transform_indices = @transform_10, window_bounds = array<i64: 16, 32>}]} {
    %c0 = arith.constant 0 : index
    %c0_0 = arith.constant 0 : index
    %0 = vector.load %arg3[%c0, %c0_0] : memref<8x32xf32, #tpu.memory_space<vmem>>, vector<8x32xf32>
    %1 = arith.truncf %0 : vector<8x32xf32> to vector<8x32xbf16>
    %c0_1 = arith.constant 0 : index
    %c0_2 = arith.constant 0 : index
    %2 = vector.load %arg1[%c0_1, %c0_2] : memref<16x8xf32, #tpu.memory_space<vmem>>, vector<16x8xf32>
    %3 = arith.truncf %2 : vector<16x8xf32> to vector<16x8xbf16>
    %cst = arith.constant dense<0.000000e+00> : vector<16x32xf32>
    %4 = tpu.matmul %3, %1, %cst {dimension_numbers = #tpu.dot_dimension_numbers<[1], [0], [0], [1], [0, 0, 1, 1], [], []>} : vector<16x8xbf16>, vector<8x32xbf16>, vector<16x32xf32> -> vector<16x32xf32>
    %c0_3 = arith.constant 0 : index
    %c0_4 = arith.constant 0 : index
    %5 = vector.load %arg2[%c0_3, %c0_4] : memref<16x8xf32, #tpu.memory_space<vmem>>, vector<16x8xf32>
    %6 = arith.truncf %5 : vector<16x8xf32> to vector<16x8xbf16>
    %cst_5 = arith.constant dense<0.000000e+00> : vector<16x32xf32>
    %7 = tpu.matmul %6, %1, %cst_5 {dimension_numbers = #tpu.dot_dimension_numbers<[1], [0], [0], [1], [0, 0, 1, 1], [], []>} : vector<16x8xbf16>, vector<8x32xbf16>, vector<16x32xf32> -> vector<16x32xf32>
    %8 = arith.truncf %4 : vector<16x32xf32> to vector<16x32xbf16>
    %c0_6 = arith.constant 0 : index
    %c0_7 = arith.constant 0 : index
    %9 = vector.load %arg4[%c0_6, %c0_7] : memref<8x32xf32, #tpu.memory_space<vmem>>, vector<8x32xf32>
    %cst_8 = arith.constant dense<0.000000e+00> : vector<8x16xf32>
    %10 = tpu.matmul %9, %4, %cst_8 {dimension_numbers = #tpu.dot_dimension_numbers<[1], [1], [0], [0], [0, 0, 1, 0], [], []>} : vector<8x32xf32>, vector<16x32xf32>, vector<8x16xf32> -> vector<8x16xf32>
    %c0_9 = arith.constant 0 : index
    %c0_10 = arith.constant 0 : index
    %11 = vector.load %arg5[%c0_9, %c0_10] : memref<32x4xf32, #tpu.memory_space<vmem>>, vector<32x4xf32>
    %cst_11 = arith.constant dense<0.000000e+00> : vector<16x4xf32>
    %12 = tpu.matmul %7, %11, %cst_11 {dimension_numbers = #tpu.dot_dimension_numbers<[1], [0], [0], [1], [0, 0, 1, 1], [], []>} : vector<16x32xf32>, vector<32x4xf32>, vector<16x4xf32> -> vector<16x4xf32>
    %c0_12 = arith.constant 0 : index
    %c0_13 = arith.constant 0 : index
    %13 = vector.load %arg10[%c0_12, %c0_13] : memref<16x16xi8, #tpu.memory_space<vmem>>, vector<16x16xi8>
    %14 = arith.sitofp %13 : vector<16x16xi8> to vector<16x16xf32>
    %cst_14 = arith.constant 0.000000e+00 : f32
    %15 = vector.broadcast %cst_14 : f32 to vector<16x16xf32>
    %16 = arith.cmpf ogt, %14, %15 : vector<16x16xf32>
    %c0_15 = arith.constant 0 : index
    %c0_16 = arith.constant 0 : index
    %17 = vector.load %arg6[%c0_15, %c0_16] : memref<4x32xf32, #tpu.memory_space<vmem>>, vector<4x32xf32>
    %cst_17 = arith.constant 0.000000e+00 : f32
    %18 = vector.broadcast %cst_17 : f32 to vector<16x32xf32>
    %19 = vector.extract_strided_slice %12 {offsets = [0, 0], sizes = [16, 1], strides = [1, 1]} : vector<16x4xf32> to vector<16x1xf32>
    %20 = vector.extract_strided_slice %10 {offsets = [0, 0], sizes = [1, 16], strides = [1, 1]} : vector<8x16xf32> to vector<1x16xf32>
    %21 = vector.broadcast %19 : vector<16x1xf32> to vector<16x16xf32>
    %22 = vector.broadcast %20 : vector<1x16xf32> to vector<16x16xf32>
    %23 = arith.addf %21, %22 : vector<16x16xf32>
    %cst_18 = arith.constant 0.000000e+00 : f32
    %24 = vector.broadcast %cst_18 : f32 to vector<16x16xf32>
    %25 = arith.cmpf ogt, %23, %24 : vector<16x16xf32>
    %cst_19 = arith.constant 2.000000e-01 : f32
    %26 = vector.broadcast %cst_19 : f32 to vector<16x16xf32>
    %27 = arith.mulf %26, %23 : vector<16x16xf32>
    %28 = arith.select %25, %23, %27 : vector<16x16xi1>, vector<16x16xf32>
    %cst_20 = arith.constant -1.000000e+30 : f32
    %29 = vector.broadcast %cst_20 : f32 to vector<16x16xf32>
    %30 = arith.select %16, %28, %29 : vector<16x16xi1>, vector<16x16xf32>
    %cst_21 = arith.constant dense<0xFF800000> : vector<16xf32>
    %31 = vector.multi_reduction <maximumf>, %30, %cst_21 [1] : vector<16x16xf32> to vector<16xf32>
    %32 = vector.shape_cast %31 : vector<16xf32> to vector<16x1xf32>
    %33 = vector.broadcast %32 : vector<16x1xf32> to vector<16x16xf32>
    %34 = arith.subf %30, %33 : vector<16x16xf32>
    %35 = math.exp %34 : vector<16x16xf32>
    %cst_22 = arith.constant dense<0.000000e+00> : vector<16xf32>
    %36 = vector.multi_reduction <add>, %35, %cst_22 [1] : vector<16x16xf32> to vector<16xf32>
    %37 = vector.shape_cast %36 : vector<16xf32> to vector<16x1xf32>
    %38 = tpu.reciprocal %37 {approx = true} : vector<16x1xf32> -> vector<16x1xf32>
    %39 = vector.broadcast %38 : vector<16x1xf32> to vector<16x16xf32>
    %40 = arith.mulf %35, %39 : vector<16x16xf32>
    %41 = arith.truncf %40 : vector<16x16xf32> to vector<16x16xbf16>
    %cst_23 = arith.constant dense<0.000000e+00> : vector<16x32xf32>
    %42 = tpu.matmul %41, %8, %cst_23 {dimension_numbers = #tpu.dot_dimension_numbers<[1], [0], [0], [1], [0, 0, 1, 1], [], []>} : vector<16x16xbf16>, vector<16x32xbf16>, vector<16x32xf32> -> vector<16x32xf32>
    %43 = vector.extract_strided_slice %17 {offsets = [0, 0], sizes = [1, 32], strides = [1, 1]} : vector<4x32xf32> to vector<1x32xf32>
    %44 = vector.broadcast %43 : vector<1x32xf32> to vector<16x32xf32>
    %45 = arith.mulf %42, %44 : vector<16x32xf32>
    %46 = arith.addf %18, %45 : vector<16x32xf32>
    %47 = vector.extract_strided_slice %12 {offsets = [0, 1], sizes = [16, 1], strides = [1, 1]} : vector<16x4xf32> to vector<16x1xf32>
    %48 = vector.extract_strided_slice %10 {offsets = [1, 0], sizes = [1, 16], strides = [1, 1]} : vector<8x16xf32> to vector<1x16xf32>
    %49 = vector.broadcast %47 : vector<16x1xf32> to vector<16x16xf32>
    %50 = vector.broadcast %48 : vector<1x16xf32> to vector<16x16xf32>
    %51 = arith.addf %49, %50 : vector<16x16xf32>
    %cst_24 = arith.constant 0.000000e+00 : f32
    %52 = vector.broadcast %cst_24 : f32 to vector<16x16xf32>
    %53 = arith.cmpf ogt, %51, %52 : vector<16x16xf32>
    %cst_25 = arith.constant 2.000000e-01 : f32
    %54 = vector.broadcast %cst_25 : f32 to vector<16x16xf32>
    %55 = arith.mulf %54, %51 : vector<16x16xf32>
    %56 = arith.select %53, %51, %55 : vector<16x16xi1>, vector<16x16xf32>
    %cst_26 = arith.constant -1.000000e+30 : f32
    %57 = vector.broadcast %cst_26 : f32 to vector<16x16xf32>
    %58 = arith.select %16, %56, %57 : vector<16x16xi1>, vector<16x16xf32>
    %cst_27 = arith.constant dense<0xFF800000> : vector<16xf32>
    %59 = vector.multi_reduction <maximumf>, %58, %cst_27 [1] : vector<16x16xf32> to vector<16xf32>
    %60 = vector.shape_cast %59 : vector<16xf32> to vector<16x1xf32>
    %61 = vector.broadcast %60 : vector<16x1xf32> to vector<16x16xf32>
    %62 = arith.subf %58, %61 : vector<16x16xf32>
    %63 = math.exp %62 : vector<16x16xf32>
    %cst_28 = arith.constant dense<0.000000e+00> : vector<16xf32>
    %64 = vector.multi_reduction <add>, %63, %cst_28 [1] : vector<16x16xf32> to vector<16xf32>
    %65 = vector.shape_cast %64 : vector<16xf32> to vector<16x1xf32>
    %66 = tpu.reciprocal %65 {approx = true} : vector<16x1xf32> -> vector<16x1xf32>
    %67 = vector.broadcast %66 : vector<16x1xf32> to vector<16x16xf32>
    %68 = arith.mulf %63, %67 : vector<16x16xf32>
    %69 = arith.truncf %68 : vector<16x16xf32> to vector<16x16xbf16>
    %cst_29 = arith.constant dense<0.000000e+00> : vector<16x32xf32>
    %70 = tpu.matmul %69, %8, %cst_29 {dimension_numbers = #tpu.dot_dimension_numbers<[1], [0], [0], [1], [0, 0, 1, 1], [], []>} : vector<16x16xbf16>, vector<16x32xbf16>, vector<16x32xf32> -> vector<16x32xf32>
    %71 = vector.extract_strided_slice %17 {offsets = [1, 0], sizes = [1, 32], strides = [1, 1]} : vector<4x32xf32> to vector<1x32xf32>
    %72 = vector.broadcast %71 : vector<1x32xf32> to vector<16x32xf32>
    %73 = arith.mulf %70, %72 : vector<16x32xf32>
    %74 = arith.addf %46, %73 : vector<16x32xf32>
    %75 = vector.extract_strided_slice %12 {offsets = [0, 2], sizes = [16, 1], strides = [1, 1]} : vector<16x4xf32> to vector<16x1xf32>
    %76 = vector.extract_strided_slice %10 {offsets = [2, 0], sizes = [1, 16], strides = [1, 1]} : vector<8x16xf32> to vector<1x16xf32>
    %77 = vector.broadcast %75 : vector<16x1xf32> to vector<16x16xf32>
    %78 = vector.broadcast %76 : vector<1x16xf32> to vector<16x16xf32>
    %79 = arith.addf %77, %78 : vector<16x16xf32>
    %cst_30 = arith.constant 0.000000e+00 : f32
    %80 = vector.broadcast %cst_30 : f32 to vector<16x16xf32>
    %81 = arith.cmpf ogt, %79, %80 : vector<16x16xf32>
    %cst_31 = arith.constant 2.000000e-01 : f32
    %82 = vector.broadcast %cst_31 : f32 to vector<16x16xf32>
    %83 = arith.mulf %82, %79 : vector<16x16xf32>
    %84 = arith.select %81, %79, %83 : vector<16x16xi1>, vector<16x16xf32>
    %cst_32 = arith.constant -1.000000e+30 : f32
    %85 = vector.broadcast %cst_32 : f32 to vector<16x16xf32>
    %86 = arith.select %16, %84, %85 : vector<16x16xi1>, vector<16x16xf32>
    %cst_33 = arith.constant dense<0xFF800000> : vector<16xf32>
    %87 = vector.multi_reduction <maximumf>, %86, %cst_33 [1] : vector<16x16xf32> to vector<16xf32>
    %88 = vector.shape_cast %87 : vector<16xf32> to vector<16x1xf32>
    %89 = vector.broadcast %88 : vector<16x1xf32> to vector<16x16xf32>
    %90 = arith.subf %86, %89 : vector<16x16xf32>
    %91 = math.exp %90 : vector<16x16xf32>
    %cst_34 = arith.constant dense<0.000000e+00> : vector<16xf32>
    %92 = vector.multi_reduction <add>, %91, %cst_34 [1] : vector<16x16xf32> to vector<16xf32>
    %93 = vector.shape_cast %92 : vector<16xf32> to vector<16x1xf32>
    %94 = tpu.reciprocal %93 {approx = true} : vector<16x1xf32> -> vector<16x1xf32>
    %95 = vector.broadcast %94 : vector<16x1xf32> to vector<16x16xf32>
    %96 = arith.mulf %91, %95 : vector<16x16xf32>
    %97 = arith.truncf %96 : vector<16x16xf32> to vector<16x16xbf16>
    %cst_35 = arith.constant dense<0.000000e+00> : vector<16x32xf32>
    %98 = tpu.matmul %97, %8, %cst_35 {dimension_numbers = #tpu.dot_dimension_numbers<[1], [0], [0], [1], [0, 0, 1, 1], [], []>} : vector<16x16xbf16>, vector<16x32xbf16>, vector<16x32xf32> -> vector<16x32xf32>
    %99 = vector.extract_strided_slice %17 {offsets = [2, 0], sizes = [1, 32], strides = [1, 1]} : vector<4x32xf32> to vector<1x32xf32>
    %100 = vector.broadcast %99 : vector<1x32xf32> to vector<16x32xf32>
    %101 = arith.mulf %98, %100 : vector<16x32xf32>
    %102 = arith.addf %74, %101 : vector<16x32xf32>
    %103 = vector.extract_strided_slice %12 {offsets = [0, 3], sizes = [16, 1], strides = [1, 1]} : vector<16x4xf32> to vector<16x1xf32>
    %104 = vector.extract_strided_slice %10 {offsets = [3, 0], sizes = [1, 16], strides = [1, 1]} : vector<8x16xf32> to vector<1x16xf32>
    %105 = vector.broadcast %103 : vector<16x1xf32> to vector<16x16xf32>
    %106 = vector.broadcast %104 : vector<1x16xf32> to vector<16x16xf32>
    %107 = arith.addf %105, %106 : vector<16x16xf32>
    %cst_36 = arith.constant 0.000000e+00 : f32
    %108 = vector.broadcast %cst_36 : f32 to vector<16x16xf32>
    %109 = arith.cmpf ogt, %107, %108 : vector<16x16xf32>
    %cst_37 = arith.constant 2.000000e-01 : f32
    %110 = vector.broadcast %cst_37 : f32 to vector<16x16xf32>
    %111 = arith.mulf %110, %107 : vector<16x16xf32>
    %112 = arith.select %109, %107, %111 : vector<16x16xi1>, vector<16x16xf32>
    %cst_38 = arith.constant -1.000000e+30 : f32
    %113 = vector.broadcast %cst_38 : f32 to vector<16x16xf32>
    %114 = arith.select %16, %112, %113 : vector<16x16xi1>, vector<16x16xf32>
    %cst_39 = arith.constant dense<0xFF800000> : vector<16xf32>
    %115 = vector.multi_reduction <maximumf>, %114, %cst_39 [1] : vector<16x16xf32> to vector<16xf32>
    %116 = vector.shape_cast %115 : vector<16xf32> to vector<16x1xf32>
    %117 = vector.broadcast %116 : vector<16x1xf32> to vector<16x16xf32>
    %118 = arith.subf %114, %117 : vector<16x16xf32>
    %119 = math.exp %118 : vector<16x16xf32>
    %cst_40 = arith.constant dense<0.000000e+00> : vector<16xf32>
    %120 = vector.multi_reduction <add>, %119, %cst_40 [1] : vector<16x16xf32> to vector<16xf32>
    %121 = vector.shape_cast %120 : vector<16xf32> to vector<16x1xf32>
    %122 = tpu.reciprocal %121 {approx = true} : vector<16x1xf32> -> vector<16x1xf32>
    %123 = vector.broadcast %122 : vector<16x1xf32> to vector<16x16xf32>
    %124 = arith.mulf %119, %123 : vector<16x16xf32>
    %125 = arith.truncf %124 : vector<16x16xf32> to vector<16x16xbf16>
    %cst_41 = arith.constant dense<0.000000e+00> : vector<16x32xf32>
    %126 = tpu.matmul %125, %8, %cst_41 {dimension_numbers = #tpu.dot_dimension_numbers<[1], [0], [0], [1], [0, 0, 1, 1], [], []>} : vector<16x16xbf16>, vector<16x32xbf16>, vector<16x32xf32> -> vector<16x32xf32>
    %127 = vector.extract_strided_slice %17 {offsets = [3, 0], sizes = [1, 32], strides = [1, 1]} : vector<4x32xf32> to vector<1x32xf32>
    %128 = vector.broadcast %127 : vector<1x32xf32> to vector<16x32xf32>
    %129 = arith.mulf %126, %128 : vector<16x32xf32>
    %130 = arith.addf %102, %129 : vector<16x32xf32>
    %c0_42 = arith.constant 0 : index
    %c0_43 = arith.constant 0 : index
    %131 = vector.load %arg7[%c0_42, %c0_43] : memref<1x32xf32, #tpu.memory_space<vmem>>, vector<1x32xf32>
    %132 = vector.broadcast %131 : vector<1x32xf32> to vector<16x32xf32>
    %133 = arith.addf %130, %132 : vector<16x32xf32>
    %c0_44 = arith.constant 0 : index
    %c0_45 = arith.constant 0 : index
    %134 = vector.load %arg8[%c0_44, %c0_45] : memref<1x32xf32, #tpu.memory_space<vmem>>, vector<1x32xf32>
    %135 = vector.broadcast %134 : vector<1x32xf32> to vector<16x32xf32>
    %136 = arith.mulf %133, %135 : vector<16x32xf32>
    %c0_46 = arith.constant 0 : index
    %c0_47 = arith.constant 0 : index
    %137 = vector.load %arg9[%c0_46, %c0_47] : memref<1x32xf32, #tpu.memory_space<vmem>>, vector<1x32xf32>
    %138 = vector.broadcast %137 : vector<1x32xf32> to vector<16x32xf32>
    %139 = arith.addf %136, %138 : vector<16x32xf32>
    %cst_48 = arith.constant 0.000000e+00 : f32
    %140 = vector.broadcast %cst_48 : f32 to vector<16x32xf32>
    %141 = arith.cmpf ogt, %139, %140 : vector<16x32xf32>
    %cst_49 = arith.constant 0.000000e+00 : f32
    %142 = vector.broadcast %cst_49 : f32 to vector<16x32xf32>
    %143 = arith.minimumf %139, %142 : vector<16x32xf32>
    %144 = math.exp %143 : vector<16x32xf32>
    %cst_50 = arith.constant 1.000000e+00 : f32
    %145 = vector.broadcast %cst_50 : f32 to vector<16x32xf32>
    %146 = arith.subf %144, %145 : vector<16x32xf32>
    %147 = arith.select %141, %139, %146 : vector<16x32xi1>, vector<16x32xf32>
    %c0_51 = arith.constant 0 : index
    %c0_52 = arith.constant 0 : index
    %148 = vector.load %arg11[%c0_51, %c0_52] : memref<16x32xf32, #tpu.memory_space<vmem>>, vector<16x32xf32>
    tpu.vector_store %arg11[%c0_51, %c0_52], %147 {strides = array<i32>} : memref<16x32xf32, #tpu.memory_space<vmem>>, vector<16x32xf32>,
    return
  }
  func.func @transform_0(%arg0: i32) -> (i32, i32) {
    %c0_i32 = arith.constant 0 : i32
    %c0_i32_0 = arith.constant 0 : i32
    %c0_i32_1 = arith.constant 0 : i32
    return %c0_i32, %c0_i32_0 : i32, i32
  }
  func.func @transform_1(%arg0: i32) -> (i32, i32) {
    %c0_i32 = arith.constant 0 : i32
    %c0_i32_0 = arith.constant 0 : i32
    return %arg0, %c0_i32 : i32, i32
  }
  func.func @transform_2(%arg0: i32) -> (i32, i32) {
    %c0_i32 = arith.constant 0 : i32
    %c0_i32_0 = arith.constant 0 : i32
    %c0_i32_1 = arith.constant 0 : i32
    return %c0_i32, %c0_i32_0 : i32, i32
  }
  func.func @transform_3(%arg0: i32) -> (i32, i32) {
    %c0_i32 = arith.constant 0 : i32
    %c0_i32_0 = arith.constant 0 : i32
    %c0_i32_1 = arith.constant 0 : i32
    return %c0_i32, %c0_i32_0 : i32, i32
  }
  func.func @transform_4(%arg0: i32) -> (i32, i32) {
    %c0_i32 = arith.constant 0 : i32
    %c0_i32_0 = arith.constant 0 : i32
    %c0_i32_1 = arith.constant 0 : i32
    return %c0_i32, %c0_i32_0 : i32, i32
  }
  func.func @transform_5(%arg0: i32) -> (i32, i32) {
    %c0_i32 = arith.constant 0 : i32
    %c0_i32_0 = arith.constant 0 : i32
    %c0_i32_1 = arith.constant 0 : i32
    return %c0_i32, %c0_i32_0 : i32, i32
  }
  func.func @transform_6(%arg0: i32) -> (i32, i32) {
    %c0_i32 = arith.constant 0 : i32
    %c0_i32_0 = arith.constant 0 : i32
    %c0_i32_1 = arith.constant 0 : i32
    return %c0_i32, %c0_i32_0 : i32, i32
  }
  func.func @transform_7(%arg0: i32) -> (i32, i32) {
    %c0_i32 = arith.constant 0 : i32
    %c0_i32_0 = arith.constant 0 : i32
    %c0_i32_1 = arith.constant 0 : i32
    return %c0_i32, %c0_i32_0 : i32, i32
  }
  func.func @transform_8(%arg0: i32) -> (i32, i32) {
    %c0_i32 = arith.constant 0 : i32
    %c0_i32_0 = arith.constant 0 : i32
    %c0_i32_1 = arith.constant 0 : i32
    return %c0_i32, %c0_i32_0 : i32, i32
  }
  func.func @transform_9(%arg0: i32) -> (i32, i32) {
    %c0_i32 = arith.constant 0 : i32
    %c0_i32_0 = arith.constant 0 : i32
    return %arg0, %c0_i32 : i32, i32
  }
  func.func @transform_10(%arg0: i32) -> (i32, i32) {
    %c0_i32 = arith.constant 0 : i32
    %c0_i32_0 = arith.constant 0 : i32
    return %arg0, %c0_i32 : i32, i32
  }
}

</mosaic_0001>

<llo_original>
// kernel: tpu_custom_call.1
$region0: #{tpu_custom_call.1}
  #allocation0 [shape = 'u32[]', space=smem, size = 0x4, offset = 0x4, fixed_abs, tag = 'smem constant byte address 0x4 - core index']
  #allocation1 [shape = 'u32[144,128]{1,0:T(1,128)}', space=vmem, size = 0x12000, scoped, tag = 'internal scratch']
  %s0 = inlined_call_operand.vmem [shape: f32[16,8], index: 0, kind: input, shape index: {}]
  %s1 = inlined_call_operand.vmem [shape: f32[16,8], index: 1, kind: input, shape index: {}]
  %s2 = inlined_call_operand.vmem [shape: f32[8,32], index: 2, kind: input, shape index: {}]
  %s3 = inlined_call_operand.vmem [shape: f32[8,32], index: 3, kind: input, shape index: {}]
  %s4 = inlined_call_operand.vmem [shape: f32[32,4], index: 4, kind: input, shape index: {}]
  %s5 = inlined_call_operand.vmem [shape: f32[4,32], index: 5, kind: input, shape index: {}]
  %s6 = inlined_call_operand.vmem [shape: f32[1,32], index: 6, kind: input, shape index: {}]
  %s7 = inlined_call_operand.vmem [shape: f32[1,32], index: 7, kind: input, shape index: {}]
  %s8 = inlined_call_operand.vmem [shape: f32[1,32], index: 8, kind: input, shape index: {}]
  %s9 = inlined_call_operand.vmem [shape: s8[16,16], index: 9, kind: input, shape index: {}]
  %s10 = inlined_call_operand.hbm [shape: f32[16,32], index: 10, kind: output, shape index: {}]
  %s11 = sld [smem:[#allocation0]]
  $region50: #{tpu_custom_call.1} parent=0
    _
  %s13 = ssub.s32 1, %s11
  %s14 = scalar_select 0, %s13, %s11
  $region1: #{tpu_custom_call.1} parent=0
    #allocation2 [shape = 'u8[8192]{0}', space=vmem, size = 0x2000, scoped, tag = 'output window, operand 0, single buffered']
    #allocation3 [shape = 's32[1]{0}', space=sflag, size = 0x4, scoped, tag = 'scoped memory for tpu_custom_call.1']
    %15 = vsyncpa [#allocation3], 0
    // Predicated region
    $region2: #{tpu_custom_call.1} parent=1 // pred_check
      _
    $region3: #{tpu_custom_call.1} parent=1 // pred_check_branch
      %17 = sbr.rel (0) target = $region5
    $region4: #{tpu_custom_call.1} parent=1 // pred_region
      _
    $region5: #{tpu_custom_call.1} parent=1 // pred_fallthru
      _
    // Predicated region
    $region6: #{tpu_custom_call.1} parent=1 // pred_check
      _
    $region7: #{tpu_custom_call.1} parent=1 // pred_check_branch
      %19 = sbr.rel (0) target = $region9
    $region8: #{tpu_custom_call.1} parent=1 // pred_region
      _
    $region9: #{tpu_custom_call.1} parent=1 // pred_fallthru
      _
    // Predicated region
    $region10: #{tpu_custom_call.1} parent=1 // pred_check
      _
    $region11: #{tpu_custom_call.1} parent=1 // pred_check_branch
      %21 = sbr.rel (0) target = $region13
    $region12: #{tpu_custom_call.1} parent=1 // pred_region
      _
    $region13: #{tpu_custom_call.1} parent=1 // pred_fallthru
      _
    // Predicated region
    $region14: #{tpu_custom_call.1} parent=1 // pred_check
      _
    $region15: #{tpu_custom_call.1} parent=1 // pred_check_branch
      %23 = sbr.rel (0) target = $region17
    $region16: #{tpu_custom_call.1} parent=1 // pred_region
      _
    $region17: #{tpu_custom_call.1} parent=1 // pred_fallthru
      _
    // Predicated region
    $region18: #{tpu_custom_call.1} parent=1 // pred_check
      _
    $region19: #{tpu_custom_call.1} parent=1 // pred_check_branch
      %25 = sbr.rel (0) target = $region21
    $region20: #{tpu_custom_call.1} parent=1 // pred_region
      _
    $region21: #{tpu_custom_call.1} parent=1 // pred_fallthru
      _
    // Predicated region
    $region22: #{tpu_custom_call.1} parent=1 // pred_check
      _
    $region23: #{tpu_custom_call.1} parent=1 // pred_check_branch
      %27 = sbr.rel (0) target = $region25
    $region24: #{tpu_custom_call.1} parent=1 // pred_region
      _
    $region25: #{tpu_custom_call.1} parent=1 // pred_fallthru
      _
    // Predicated region
    $region26: #{tpu_custom_call.1} parent=1 // pred_check
      _
    $region27: #{tpu_custom_call.1} parent=1 // pred_check_branch
      %29 = sbr.rel (0) target = $region29
    $region28: #{tpu_custom_call.1} parent=1 // pred_region
      _
    $region29: #{tpu_custom_call.1} parent=1 // pred_fallthru
      _
    // Predicated region
    $region30: #{tpu_custom_call.1} parent=1 // pred_check
      _
    $region31: #{tpu_custom_call.1} parent=1 // pred_check_branch
      %31 = sbr.rel (0) target = $region33
    $region32: #{tpu_custom_call.1} parent=1 // pred_region
      _
    $region33: #{tpu_custom_call.1} parent=1 // pred_fallthru
      _
    // Predicated region
    $region34: #{tpu_custom_call.1} parent=1 // pred_check
      _
    $region35: #{tpu_custom_call.1} parent=1 // pred_check_branch
      %33 = sbr.rel (0) target = $region37
    $region36: #{tpu_custom_call.1} parent=1 // pred_region
      _
    $region37: #{tpu_custom_call.1} parent=1 // pred_fallthru
      _
    // Predicated region
    $region38: #{tpu_custom_call.1} parent=1 // pred_check
      _
    $region39: #{tpu_custom_call.1} parent=1 // pred_check_branch
      %35 = sbr.rel (0) target = $region41
    $region40: #{tpu_custom_call.1} parent=1 // pred_region
      _
    $region41: #{tpu_custom_call.1} parent=1 // pred_fallthru
      _
    %v37 = vld [vmem:[%s2] sm:$0xff]
    %v38 = vpack.c.bf16 %v37, %v37
    %v39 = vld [vmem:[%s0] sm:$0xff]
    %v40 = vld [vmem:[%s0 + $0x8] sm:$0xff]
    %v41 = vpack.c.bf16 %v40, %v39
    %vm42 = vcmask 64512
    %v44 = vsel %vm42, %v41, 0
    %vm46 = vcmask 1043456
    %v48 = vsel %vm46, %v38, 0
    %50 = vmatprep.subr.bf16.mxu0 0
    %51 = vmatpush1.bf16.msra.mxu0 %v48
    %52 = vmatprep.subr.bf16.mxu0 0
    %53 = vmatpush1.bf16.msra.mxu0 0
    %54 = vmatprep.subr.bf16.mxu0 0
    %55 = vmatpush1.bf16.msra.mxu0 0
    %56 = vmatprep.subr.bf16.mxu0 0
    %57 = vmatpush1.bf16.msra.mxu0 0
    %58 = vmatprep.subr.bf16.mxu0 0
    %59 = vmatpush1.bf16.msra.mxu0 0
    %60 = vmatprep.subr.bf16.mxu0 0
    %61 = vmatpush1.bf16.msra.mxu0 0
    %62 = vmatprep.subr.bf16.mxu0 0
    %63 = vmatpush1.bf16.msra.mxu0 0
    %64 = vmatprep.subr.bf16.mxu0 0
    %65 = vmatpush1.bf16.msra.mxu0 0
    %66 = vmatprep.subr.bf16.mxu0 0
    %67 = vmatpush1.bf16.msra.mxu0 0
    %68 = vmatprep.subr.bf16.mxu0 0
    %69 = vmatpush1.bf16.msra.mxu0 0
    %70 = vmatprep.subr.bf16.mxu0 0
    %71 = vmatpush1.bf16.msra.mxu0 0
    %72 = vmatprep.subr.bf16.mxu0 0
    %73 = vmatpush1.bf16.msra.mxu0 0
    %74 = vmatprep.subr.bf16.mxu0 0
    %75 = vmatpush1.bf16.msra.mxu0 0
    %76 = vmatprep.subr.bf16.mxu0 0
    %77 = vmatpush1.bf16.msra.mxu0 0
    %78 = vmatprep.subr.bf16.mxu0 0
    %79 = vmatpush1.bf16.msra.mxu0 0
    %80 = vmatprep.subr.bf16.mxu0 0
    %81 = vmatpush1.bf16.msra.mxu0 0
    %82 = vmatprep.mubr.bf16.mxu0 0
    %83 = vmatmul.mubr.bf16.gmra.mrb[0].mxu0 %v44
    %v84 = vpop.f32.mrb[0].mxu0
    %v85 = vadd.f32 0.0, %v84
    %v86 = vpop.f32.mrb[0].mxu0
    %v87 = vpop.f32.mrb[0].mxu0
    %v88 = vadd.f32 0.0, %v87
    %v89 = vpop.f32.mrb[0].mxu0
    %90 = vdwg.mxu0
    %v91 = vld [vmem:[%s1] sm:$0xff]
    %v92 = vld [vmem:[%s1 + $0x8] sm:$0xff]
    %v93 = vpack.c.bf16 %v92, %v91
    %v95 = vsel %vm42, %v93, 0
    %97 = vmatprep.subr.bf16.mxu0 0
    %98 = vmatpush1.bf16.msra.mxu0 %v48
    %99 = vmatprep.subr.bf16.mxu0 0
    %100 = vmatpush1.bf16.msra.mxu0 0
    %101 = vmatprep.subr.bf16.mxu0 0
    %102 = vmatpush1.bf16.msra.mxu0 0
    %103 = vmatprep.subr.bf16.mxu0 0
    %104 = vmatpush1.bf16.msra.mxu0 0
    %105 = vmatprep.subr.bf16.mxu0 0
    %106 = vmatpush1.bf16.msra.mxu0 0
    %107 = vmatprep.subr.bf16.mxu0 0
    %108 = vmatpush1.bf16.msra.mxu0 0
    %109 = vmatprep.subr.bf16.mxu0 0
    %110 = vmatpush1.bf16.msra.mxu0 0
    %111 = vmatprep.subr.bf16.mxu0 0
    %112 = vmatpush1.bf16.msra.mxu0 0
    %113 = vmatprep.subr.bf16.mxu0 0
    %114 = vmatpush1.bf16.msra.mxu0 0
    %115 = vmatprep.subr.bf16.mxu0 0
    %116 = vmatpush1.bf16.msra.mxu0 0
    %117 = vmatprep.subr.bf16.mxu0 0
    %118 = vmatpush1.bf16.msra.mxu0 0
    %119 = vmatprep.subr.bf16.mxu0 0
    %120 = vmatpush1.bf16.msra.mxu0 0
    %121 = vmatprep.subr.bf16.mxu0 0
    %122 = vmatpush1.bf16.msra.mxu0 0
    %123 = vmatprep.subr.bf16.mxu0 0
    %124 = vmatpush1.bf16.msra.mxu0 0
    %125 = vmatprep.subr.bf16.mxu0 0
    %126 = vmatpush1.bf16.msra.mxu0 0
    %127 = vmatprep.subr.bf16.mxu0 0
    %128 = vmatpush1.bf16.msra.mxu0 0
    %129 = vmatprep.mubr.bf16.mxu0 0
    %130 = vmatmul.mubr.bf16.gmra.mrb[0].mxu0 %v95
    %v131 = vpop.f32.mrb[0].mxu0
    %v132 = vadd.f32 0.0, %v131
    %v133 = vpop.f32.mrb[0].mxu0
    %v134 = vpop.f32.mrb[0].mxu0
    %v135 = vadd.f32 0.0, %v134
    %v136 = vpop.f32.mrb[0].mxu0
    %137 = vdwg.mxu0
    %v138 = vpack.c.bf16 %v88, %v85
    %v139 = vld [vmem:[%s3] sm:$0xff]
    %vm140 = vcmask 261120
    %v142 = vsel %vm140, %v139, 0
    %v145 = vsel %vm140, %v85, 0
    %v148 = vsel %vm140, %v88, 0
    %150 = vmatprep.subr.mxu0 0.0
    %151 = vmatpush1.xpose.msra.mxu0 %v145
    %152 = vmatprep.subr.mxu0 0.0
    %153 = vmatpush1.xpose.msra.mxu0 %v148
    %154 = vmatprep.subr.mxu0 0.0
    %155 = vmatpush1.xpose.msra.mxu0 0.0
    %156 = vmatprep.subr.mxu0 0.0
    %157 = vmatpush1.xpose.msra.mxu0 0.0
    %158 = vmatprep.subr.mxu0 0.0
    %159 = vmatpush1.xpose.msra.mxu0 0.0
    %160 = vmatprep.subr.mxu0 0.0
    %161 = vmatpush1.xpose.msra.mxu0 0.0
    %162 = vmatprep.subr.mxu0 0.0
    %163 = vmatpush1.xpose.msra.mxu0 0.0
    %164 = vmatprep.subr.mxu0 0.0
    %165 = vmatpush1.xpose.msra.mxu0 0.0
    %166 = vmatprep.subr.mxu0 0.0
    %167 = vmatpush1.xpose.msra.mxu0 0.0
    %168 = vmatprep.subr.mxu0 0.0
    %169 = vmatpush1.xpose.msra.mxu0 0.0
    %170 = vmatprep.subr.mxu0 0.0
    %171 = vmatpush1.xpose.msra.mxu0 0.0
    %172 = vmatprep.subr.mxu0 0.0
    %173 = vmatpush1.xpose.msra.mxu0 0.0
    %174 = vmatprep.subr.mxu0 0.0
    %175 = vmatpush1.xpose.msra.mxu0 0.0
    %176 = vmatprep.subr.mxu0 0.0
    %177 = vmatpush1.xpose.msra.mxu0 0.0
    %178 = vmatprep.subr.mxu0 0.0
    %179 = vmatpush1.xpose.msra.mxu0 0.0
    %180 = vmatprep.subr.mxu0 0.0
    %181 = vmatpush1.xpose.msra.mxu0 0.0
    %182 = vmatprep.subr.mxu0 0.0
    %183 = vmatpush1.xpose.msra.mxu0 0.0
    %184 = vmatprep.subr.mxu0 0.0
    %185 = vmatpush1.xpose.msra.mxu0 0.0
    %186 = vmatprep.subr.mxu0 0.0
    %187 = vmatpush1.xpose.msra.mxu0 0.0
    %188 = vmatprep.subr.mxu0 0.0
    %189 = vmatpush1.xpose.msra.mxu0 0.0
    %190 = vmatprep.subr.mxu0 0.0
    %191 = vmatpush1.xpose.msra.mxu0 0.0
    %192 = vmatprep.subr.mxu0 0.0
    %193 = vmatpush1.xpose.msra.mxu0 0.0
    %194 = vmatprep.subr.mxu0 0.0
    %195 = vmatpush1.xpose.msra.mxu0 0.0
    %196 = vmatprep.subr.mxu0 0.0
    %197 = vmatpush1.xpose.msra.mxu0 0.0
    %198 = vmatprep.subr.mxu0 0.0
    %199 = vmatpush1.xpose.msra.mxu0 0.0
    %200 = vmatprep.subr.mxu0 0.0
    %201 = vmatpush1.xpose.msra.mxu0 0.0
    %202 = vmatprep.subr.mxu0 0.0
    %203 = vmatpush1.xpose.msra.mxu0 0.0
    %204 = vmatprep.subr.mxu0 0.0
    %205 = vmatpush1.xpose.msra.mxu0 0.0
    %206 = vmatprep.subr.mxu0 0.0
    %207 = vmatpush1.xpose.msra.mxu0 0.0
    %208 = vmatprep.subr.mxu0 0.0
    %209 = vmatpush1.xpose.msra.mxu0 0.0
    %210 = vmatprep.subr.mxu0 0.0
    %211 = vmatpush1.xpose.msra.mxu0 0.0
    %212 = vmatprep.subr.mxu0 0.0
    %213 = vmatpush1.xpose.msra.mxu0 0.0
    %214 = vmatprep.mubr.f32.mxu0 0.0
    %215 = vmatmul.mubr.f32.gmra.mrb[0].mxu0 %v142
    %v216 = vpop.f32.mrb[0].mxu0
    %v217 = vadd.f32 0.0, %v216
    %v218 = vpop.f32.mrb[0].mxu0
    %219 = vdwg.mxu0
    %v220 = vld [vmem:[%s4] sm:$0xff]
    %v221 = vld [vmem:[%s4 + $0x8] sm:$0xff]
    %v222 = vld [vmem:[%s4 + $0x10] sm:$0xff]
    %v223 = vld [vmem:[%s4 + $0x18] sm:$0xff]
    %v225 = vsel %vm140, %v132, 0
    %v228 = vsel %vm140, %v135, 0
    %230 = vmatprep.subr.mxu0 0.0
    %231 = vmatpush1.msra.mxu0 %v220
    %232 = vmatprep.subr.mxu0 0.0
    %233 = vmatpush1.msra.mxu0 %v221
    %234 = vmatprep.subr.mxu0 0.0
    %235 = vmatpush1.msra.mxu0 %v222
    %236 = vmatprep.subr.mxu0 0.0
    %237 = vmatpush1.msra.mxu0 %v223
    %238 = vmatprep.subr.mxu0 0.0
    %239 = vmatpush1.msra.mxu0 0.0
    %240 = vmatprep.subr.mxu0 0.0
    %241 = vmatpush1.msra.mxu0 0.0
    %242 = vmatprep.subr.mxu0 0.0
    %243 = vmatpush1.msra.mxu0 0.0
    %244 = vmatprep.subr.mxu0 0.0
    %245 = vmatpush1.msra.mxu0 0.0
    %246 = vmatprep.subr.mxu0 0.0
    %247 = vmatpush1.msra.mxu0 0.0
    %248 = vmatprep.subr.mxu0 0.0
    %249 = vmatpush1.msra.mxu0 0.0
    %250 = vmatprep.subr.mxu0 0.0
    %251 = vmatpush1.msra.mxu0 0.0
    %252 = vmatprep.subr.mxu0 0.0
    %253 = vmatpush1.msra.mxu0 0.0
    %254 = vmatprep.subr.mxu0 0.0
    %255 = vmatpush1.msra.mxu0 0.0
    %256 = vmatprep.subr.mxu0 0.0
    %257 = vmatpush1.msra.mxu0 0.0
    %258 = vmatprep.subr.mxu0 0.0
    %259 = vmatpush1.msra.mxu0 0.0
    %260 = vmatprep.subr.mxu0 0.0
    %261 = vmatpush1.msra.mxu0 0.0
    %262 = vmatprep.subr.mxu0 0.0
    %263 = vmatpush1.msra.mxu0 0.0
    %264 = vmatprep.subr.mxu0 0.0
    %265 = vmatpush1.msra.mxu0 0.0
    %266 = vmatprep.subr.mxu0 0.0
    %267 = vmatpush1.msra.mxu0 0.0
    %268 = vmatprep.subr.mxu0 0.0
    %269 = vmatpush1.msra.mxu0 0.0
    %270 = vmatprep.subr.mxu0 0.0
    %271 = vmatpush1.msra.mxu0 0.0
    %272 = vmatprep.subr.mxu0 0.0
    %273 = vmatpush1.msra.mxu0 0.0
    %274 = vmatprep.subr.mxu0 0.0
    %275 = vmatpush1.msra.mxu0 0.0
    %276 = vmatprep.subr.mxu0 0.0
    %277 = vmatpush1.msra.mxu0 0.0
    %278 = vmatprep.subr.mxu0 0.0
    %279 = vmatpush1.msra.mxu0 0.0
    %280 = vmatprep.subr.mxu0 0.0
    %281 = vmatpush1.msra.mxu0 0.0
    %282 = vmatprep.subr.mxu0 0.0
    %283 = vmatpush1.msra.mxu0 0.0
    %284 = vmatprep.subr.mxu0 0.0
    %285 = vmatpush1.msra.mxu0 0.0
    %286 = vmatprep.subr.mxu0 0.0
    %287 = vmatpush1.msra.mxu0 0.0
    %288 = vmatprep.subr.mxu0 0.0
    %289 = vmatpush1.msra.mxu0 0.0
    %290 = vmatprep.subr.mxu0 0.0
    %291 = vmatpush1.msra.mxu0 0.0
    %292 = vmatprep.subr.mxu0 0.0
    %293 = vmatpush1.msra.mxu0 0.0
    %294 = vmatprep.mubr.f32.mxu0 0.0
    %295 = vmatmul.mubr.f32.gmra.mrb[0].mxu0 %v225
    %v296 = vpop.f32.mrb[0].mxu0
    %v297 = vadd.f32 0.0, %v296
    %v298 = vpop.f32.mrb[0].mxu0
    %299 = vmatprep.mubr.f32.mxu0 0.0
    %300 = vmatmul.mubr.f32.gmra.mrb[0].mxu0 %v228
    %v301 = vpop.f32.mrb[0].mxu0
    %v302 = vadd.f32 0.0, %v301
    %v303 = vpop.f32.mrb[0].mxu0
    %304 = vdwg.mxu0
    %v305 = vld [vmem:[%s9] sm:$0x3]
    %v306 = vld [vmem:[%s9 + $0x2] sm:$0x3]
    %v307 = vunpack.c.0.s8 %v305
    %v308 = vunpack.c.0.s8 %v306
    %v309 = vcvt.s32.f32 %v307
    %v310 = vcvt.s32.f32 %v308
    %vm311 = vcmp.gt.f32.partialorder %v309, 0.0
    %vm312 = vcmp.gt.f32.partialorder %v310, 0.0
    %v313 = vld [vmem:[%s5] sm:$0xf]
    %315 = vset.pattern.permute.xlu0 0
    %316 = vperm.xlu0 %315, %v297
    %v317 = vpop.permute.xlu0 %316
    %320 = vset.pattern.permute.xlu0 0
    %321 = vperm.xlu0 %320, %v302
    %v322 = vpop.permute.xlu0 %321
    %v324 = vlaneseq
    %v325 = vshrl.u32 %v324, 7
    %v326 = vsub.s32 0, %v325
    %v327 = vrot.slane %v217, %v326
    %v328 = vadd.f32 %v317, %v327
    %v329 = vadd.f32 %v322, %v327
    %vm330 = vcmp.gt.f32.partialorder %v328, 0.0
    %vm331 = vcmp.gt.f32.partialorder %v329, 0.0
    %v332 = vmul.f32 %v328, 0.2
    %v333 = vmul.f32 %v329, 0.2
    %v334 = vsel %vm330, %v328, %v332
    %v335 = vsel %vm331, %v329, %v333
    %v336 = vsel %vm311, %v334, -1e+30
    %v337 = vsel %vm312, %v335, -1e+30
    %vm338 = vcmask 130048
    %v339 = vsel %vm338, %v336, -inf
    %340 = vmax.xlane.f32.xlu0 %v339
    %v341 = vpop.xlane.xlu0 %340
    %v342 = vsel %vm338, %v337, -inf
    %343 = vmax.xlane.f32.xlu0 %v342
    %v344 = vpop.xlane.xlu0 %343
    %v345 = vsub.f32 %v336, %v341
    %v346 = vsub.f32 %v337, %v344
    %v347 = vmul.f32 %v345, 1.442695
    %v348 = vpow.pop %v347
    %v349 = vmul.f32 %v346, 1.442695
    %v350 = vpow.pop %v349
    %v351 = vsel %vm338, %v348, 0.0
    %352 = vadd.xlane.f32.xlu0 %v351
    %v353 = vpop.xlane.xlu0 %352
    %v354 = vsel %vm338, %v350, 0.0
    %355 = vadd.xlane.f32.xlu0 %v354
    %v356 = vpop.xlane.xlu0 %355
    %v357 = vrcp.pop %v353
    %v358 = vrcp.pop %v356
    %v359 = vmul.f32 %v348, %v357
    %v360 = vmul.f32 %v350, %v358
    %v361 = vpack.c.bf16 %v360, %v359
    %v363 = vsel %vm338, %v361, 0
    %365 = vmatprep.subr.bf16.mxu0 0
    %366 = vmatpush1.bf16.msra.mxu0 %v138
    %367 = vmatprep.subr.bf16.mxu0 0
    %368 = vmatpush1.bf16.msra.mxu0 0
    %369 = vmatprep.subr.bf16.mxu0 0
    %370 = vmatpush1.bf16.msra.mxu0 0
    %371 = vmatprep.subr.bf16.mxu0 0
    %372 = vmatpush1.bf16.msra.mxu0 0
    %373 = vmatprep.subr.bf16.mxu0 0
    %374 = vmatpush1.bf16.msra.mxu0 0
    %375 = vmatprep.subr.bf16.mxu0 0
    %376 = vmatpush1.bf16.msra.mxu0 0
    %377 = vmatprep.subr.bf16.mxu0 0
    %378 = vmatpush1.bf16.msra.mxu0 0
    %379 = vmatprep.subr.bf16.mxu0 0
    %380 = vmatpush1.bf16.msra.mxu0 0
    %381 = vmatprep.subr.bf16.mxu0 0
    %382 = vmatpush1.bf16.msra.mxu0 0
    %383 = vmatprep.subr.bf16.mxu0 0
    %384 = vmatpush1.bf16.msra.mxu0 0
    %385 = vmatprep.subr.bf16.mxu0 0
    %386 = vmatpush1.bf16.msra.mxu0 0
    %387 = vmatprep.subr.bf16.mxu0 0
    %388 = vmatpush1.bf16.msra.mxu0 0
    %389 = vmatprep.subr.bf16.mxu0 0
    %390 = vmatpush1.bf16.msra.mxu0 0
    %391 = vmatprep.subr.bf16.mxu0 0
    %392 = vmatpush1.bf16.msra.mxu0 0
    %393 = vmatprep.subr.bf16.mxu0 0
    %394 = vmatpush1.bf16.msra.mxu0 0
    %395 = vmatprep.subr.bf16.mxu0 0
    %396 = vmatpush1.bf16.msra.mxu0 0
    %397 = vmatprep.mubr.bf16.mxu0 0
    %398 = vmatmul.mubr.bf16.gmra.mrb[0].mxu0 %v363
    %v399 = vpop.f32.mrb[0].mxu0
    %v400 = vadd.f32 0.0, %v399
    %v401 = vpop.f32.mrb[0].mxu0
    %v402 = vpop.f32.mrb[0].mxu0
    %v403 = vadd.f32 0.0, %v402
    %v404 = vpop.f32.mrb[0].mxu0
    %405 = vdwg.mxu0
    %v406 = vlaneseq
    %v407 = vshrl.u32 %v406, 7
    %v408 = vsub.s32 0, %v407
    %v409 = vrot.slane %v313, %v408
    %v410 = vmul.f32 %v400, %v409
    %v411 = vmul.f32 %v403, %v409
    %v412 = vadd.f32 %v410, 0.0
    %v413 = vadd.f32 %v411, 0.0
    %414 = vset.pattern.permute.xlu0 1
    %415 = vperm.xlu0 %414, %v297
    %v416 = vpop.permute.xlu0 %415
    %418 = vset.pattern.permute.xlu0 1
    %419 = vperm.xlu0 %418, %v302
    %v420 = vpop.permute.xlu0 %419
    %v422 = vlaneseq
    %v423 = vshrl.u32 %v422, 7
    %v424 = vsub.s32 1, %v423
    %v425 = vrot.slane %v217, %v424
    %v426 = vadd.f32 %v416, %v425
    %v427 = vadd.f32 %v420, %v425
    %vm428 = vcmp.gt.f32.partialorder %v426, 0.0
    %vm429 = vcmp.gt.f32.partialorder %v427, 0.0
    %v430 = vmul.f32 %v426, 0.2
    %v431 = vmul.f32 %v427, 0.2
    %v432 = vsel %vm428, %v426, %v430
    %v433 = vsel %vm429, %v427, %v431
    %v434 = vsel %vm311, %v432, -1e+30
    %v435 = vsel %vm312, %v433, -1e+30
    %v436 = vsel %vm338, %v434, -inf
    %437 = vmax.xlane.f32.xlu0 %v436
    %v438 = vpop.xlane.xlu0 %437
    %v439 = vsel %vm338, %v435, -inf
    %440 = vmax.xlane.f32.xlu0 %v439
    %v441 = vpop.xlane.xlu0 %440
    %v442 = vsub.f32 %v434, %v438
    %v443 = vsub.f32 %v435, %v441
    %v444 = vmul.f32 %v442, 1.442695
    %v445 = vpow.pop %v444
    %v446 = vmul.f32 %v443, 1.442695
    %v447 = vpow.pop %v446
    %v448 = vsel %vm338, %v445, 0.0
    %449 = vadd.xlane.f32.xlu0 %v448
    %v450 = vpop.xlane.xlu0 %449
    %v451 = vsel %vm338, %v447, 0.0
    %452 = vadd.xlane.f32.xlu0 %v451
    %v453 = vpop.xlane.xlu0 %452
    %v454 = vrcp.pop %v450
    %v455 = vrcp.pop %v453
    %v456 = vmul.f32 %v445, %v454
    %v457 = vmul.f32 %v447, %v455
    %v458 = vpack.c.bf16 %v457, %v456
    %v460 = vsel %vm338, %v458, 0
    %462 = vmatprep.subr.bf16.mxu0 0
    %463 = vmatpush1.bf16.msra.mxu0 %v138
    %464 = vmatprep.subr.bf16.mxu0 0
    %465 = vmatpush1.bf16.msra.mxu0 0
    %466 = vmatprep.subr.bf16.mxu0 0
    %467 = vmatpush1.bf16.msra.mxu0 0
    %468 = vmatprep.subr.bf16.mxu0 0
    %469 = vmatpush1.bf16.msra.mxu0 0
    %470 = vmatprep.subr.bf16.mxu0 0
    %471 = vmatpush1.bf16.msra.mxu0 0
    %472 = vmatprep.subr.bf16.mxu0 0
    %473 = vmatpush1.bf16.msra.mxu0 0
    %474 = vmatprep.subr.bf16.mxu0 0
    %475 = vmatpush1.bf16.msra.mxu0 0
    %476 = vmatprep.subr.bf16.mxu0 0
    %477 = vmatpush1.bf16.msra.mxu0 0
    %478 = vmatprep.subr.bf16.mxu0 0
    %479 = vmatpush1.bf16.msra.mxu0 0
    %480 = vmatprep.subr.bf16.mxu0 0
    %481 = vmatpush1.bf16.msra.mxu0 0
    %482 = vmatprep.subr.bf16.mxu0 0
    %483 = vmatpush1.bf16.msra.mxu0 0
    %484 = vmatprep.subr.bf16.mxu0 0
    %485 = vmatpush1.bf16.msra.mxu0 0
    %486 = vmatprep.subr.bf16.mxu0 0
    %487 = vmatpush1.bf16.msra.mxu0 0
    %488 = vmatprep.subr.bf16.mxu0 0
    %489 = vmatpush1.bf16.msra.mxu0 0
    %490 = vmatprep.subr.bf16.mxu0 0
    %491 = vmatpush1.bf16.msra.mxu0 0
    %492 = vmatprep.subr.bf16.mxu0 0
    %493 = vmatpush1.bf16.msra.mxu0 0
    %494 = vmatprep.mubr.bf16.mxu0 0
    %495 = vmatmul.mubr.bf16.gmra.mrb[0].mxu0 %v460
    %v496 = vpop.f32.mrb[0].mxu0
    %v497 = vadd.f32 0.0, %v496
    %v498 = vpop.f32.mrb[0].mxu0
    %v499 = vpop.f32.mrb[0].mxu0
    %v500 = vadd.f32 0.0, %v499
    %v501 = vpop.f32.mrb[0].mxu0
    %502 = vdwg.mxu0
    %v503 = vlaneseq
    %v504 = vshrl.u32 %v503, 7
    %v505 = vsub.s32 1, %v504
    %v506 = vrot.slane %v313, %v505
    %v507 = vmul.f32 %v497, %v506
    %v508 = vmul.f32 %v500, %v506
    %v509 = vadd.f32 %v412, %v507
    %v510 = vadd.f32 %v413, %v508
    %511 = vset.pattern.permute.xlu0 2
    %512 = vperm.xlu0 %511, %v297
    %v513 = vpop.permute.xlu0 %512
    %515 = vset.pattern.permute.xlu0 2
    %516 = vperm.xlu0 %515, %v302
    %v517 = vpop.permute.xlu0 %516
    %v519 = vlaneseq
    %v520 = vshrl.u32 %v519, 7
    %v521 = vsub.s32 2, %v520
    %v522 = vrot.slane %v217, %v521
    %v523 = vadd.f32 %v513, %v522
    %v524 = vadd.f32 %v517, %v522
    %vm525 = vcmp.gt.f32.partialorder %v523, 0.0
    %vm526 = vcmp.gt.f32.partialorder %v524, 0.0
    %v527 = vmul.f32 %v523, 0.2
    %v528 = vmul.f32 %v524, 0.2
    %v529 = vsel %vm525, %v523, %v527
    %v530 = vsel %vm526, %v524, %v528
    %v531 = vsel %vm311, %v529, -1e+30
    %v532 = vsel %vm312, %v530, -1e+30
    %v533 = vsel %vm338, %v531, -inf
    %534 = vmax.xlane.f32.xlu0 %v533
    %v535 = vpop.xlane.xlu0 %534
    %v536 = vsel %vm338, %v532, -inf
    %537 = vmax.xlane.f32.xlu0 %v536
    %v538 = vpop.xlane.xlu0 %537
    %v539 = vsub.f32 %v531, %v535
    %v540 = vsub.f32 %v532, %v538
    %v541 = vmul.f32 %v539, 1.442695
    %v542 = vpow.pop %v541
    %v543 = vmul.f32 %v540, 1.442695
    %v544 = vpow.pop %v543
    %v545 = vsel %vm338, %v542, 0.0
    %546 = vadd.xlane.f32.xlu0 %v545
    %v547 = vpop.xlane.xlu0 %546
    %v548 = vsel %vm338, %v544, 0.0
    %549 = vadd.xlane.f32.xlu0 %v548
    %v550 = vpop.xlane.xlu0 %549
    %v551 = vrcp.pop %v547
    %v552 = vrcp.pop %v550
    %v553 = vmul.f32 %v542, %v551
    %v554 = vmul.f32 %v544, %v552
    %v555 = vpack.c.bf16 %v554, %v553
    %v557 = vsel %vm338, %v555, 0
    %559 = vmatprep.subr.bf16.mxu0 0
    %560 = vmatpush1.bf16.msra.mxu0 %v138
    %561 = vmatprep.subr.bf16.mxu0 0
    %562 = vmatpush1.bf16.msra.mxu0 0
    %563 = vmatprep.subr.bf16.mxu0 0
    %564 = vmatpush1.bf16.msra.mxu0 0
    %565 = vmatprep.subr.bf16.mxu0 0
    %566 = vmatpush1.bf16.msra.mxu0 0
    %567 = vmatprep.subr.bf16.mxu0 0
    %568 = vmatpush1.bf16.msra.mxu0 0
    %569 = vmatprep.subr.bf16.mxu0 0
    %570 = vmatpush1.bf16.msra.mxu0 0
    %571 = vmatprep.subr.bf16.mxu0 0
    %572 = vmatpush1.bf16.msra.mxu0 0
    %573 = vmatprep.subr.bf16.mxu0 0
    %574 = vmatpush1.bf16.msra.mxu0 0
    %575 = vmatprep.subr.bf16.mxu0 0
    %576 = vmatpush1.bf16.msra.mxu0 0
    %577 = vmatprep.subr.bf16.mxu0 0
    %578 = vmatpush1.bf16.msra.mxu0 0
    %579 = vmatprep.subr.bf16.mxu0 0
    %580 = vmatpush1.bf16.msra.mxu0 0
    %581 = vmatprep.subr.bf16.mxu0 0
    %582 = vmatpush1.bf16.msra.mxu0 0
    %583 = vmatprep.subr.bf16.mxu0 0
    %584 = vmatpush1.bf16.msra.mxu0 0
    %585 = vmatprep.subr.bf16.mxu0 0
    %586 = vmatpush1.bf16.msra.mxu0 0
    %587 = vmatprep.subr.bf16.mxu0 0
    %588 = vmatpush1.bf16.msra.mxu0 0
    %589 = vmatprep.subr.bf16.mxu0 0
    %590 = vmatpush1.bf16.msra.mxu0 0
    %591 = vmatprep.mubr.bf16.mxu0 0
    %592 = vmatmul.mubr.bf16.gmra.mrb[0].mxu0 %v557
    %v593 = vpop.f32.mrb[0].mxu0
    %v594 = vadd.f32 0.0, %v593
    %v595 = vpop.f32.mrb[0].mxu0
    %v596 = vpop.f32.mrb[0].mxu0
    %v597 = vadd.f32 0.0, %v596
    %v598 = vpop.f32.mrb[0].mxu0
    %599 = vdwg.mxu0
    %v600 = vlaneseq
    %v601 = vshrl.u32 %v600, 7
    %v602 = vsub.s32 2, %v601
    %v603 = vrot.slane %v313, %v602
    %v604 = vmul.f32 %v594, %v603
    %v605 = vmul.f32 %v597, %v603
    %v606 = vadd.f32 %v509, %v604
    %v607 = vadd.f32 %v510, %v605
    %608 = vset.pattern.permute.xlu0 3
    %609 = vperm.xlu0 %608, %v297
    %v610 = vpop.permute.xlu0 %609
    %612 = vset.pattern.permute.xlu0 3
    %613 = vperm.xlu0 %612, %v302
    %v614 = vpop.permute.xlu0 %613
    %v616 = vlaneseq
    %v617 = vshrl.u32 %v616, 7
    %v618 = vsub.s32 3, %v617
    %v619 = vrot.slane %v217, %v618
    %v620 = vadd.f32 %v610, %v619
    %v621 = vadd.f32 %v614, %v619
    %vm622 = vcmp.gt.f32.partialorder %v620, 0.0
    %vm623 = vcmp.gt.f32.partialorder %v621, 0.0
    %v624 = vmul.f32 %v620, 0.2
    %v625 = vmul.f32 %v621, 0.2
    %v626 = vsel %vm622, %v620, %v624
    %v627 = vsel %vm623, %v621, %v625
    %v628 = vsel %vm311, %v626, -1e+30
    %v629 = vsel %vm312, %v627, -1e+30
    %v630 = vsel %vm338, %v628, -inf
    %631 = vmax.xlane.f32.xlu0 %v630
    %v632 = vpop.xlane.xlu0 %631
    %v633 = vsel %vm338, %v629, -inf
    %634 = vmax.xlane.f32.xlu0 %v633
    %v635 = vpop.xlane.xlu0 %634
    %v636 = vsub.f32 %v628, %v632
    %v637 = vsub.f32 %v629, %v635
    %v638 = vmul.f32 %v636, 1.442695
    %v639 = vpow.pop %v638
    %v640 = vmul.f32 %v637, 1.442695
    %v641 = vpow.pop %v640
    %v642 = vsel %vm338, %v639, 0.0
    %643 = vadd.xlane.f32.xlu0 %v642
    %v644 = vpop.xlane.xlu0 %643
    %v645 = vsel %vm338, %v641, 0.0
    %646 = vadd.xlane.f32.xlu0 %v645
    %v647 = vpop.xlane.xlu0 %646
    %v648 = vrcp.pop %v644
    %v649 = vrcp.pop %v647
    %v650 = vmul.f32 %v639, %v648
    %v651 = vmul.f32 %v641, %v649
    %v652 = vpack.c.bf16 %v651, %v650
    %v654 = vsel %vm338, %v652, 0
    %656 = vmatprep.subr.bf16.mxu0 0
    %657 = vmatpush1.bf16.msra.mxu0 %v138
    %658 = vmatprep.subr.bf16.mxu0 0
    %659 = vmatpush1.bf16.msra.mxu0 0
    %660 = vmatprep.subr.bf16.mxu0 0
    %661 = vmatpush1.bf16.msra.mxu0 0
    %662 = vmatprep.subr.bf16.mxu0 0
    %663 = vmatpush1.bf16.msra.mxu0 0
    %664 = vmatprep.subr.bf16.mxu0 0
    %665 = vmatpush1.bf16.msra.mxu0 0
    %666 = vmatprep.subr.bf16.mxu0 0
    %667 = vmatpush1.bf16.msra.mxu0 0
    %668 = vmatprep.subr.bf16.mxu0 0
    %669 = vmatpush1.bf16.msra.mxu0 0
    %670 = vmatprep.subr.bf16.mxu0 0
    %671 = vmatpush1.bf16.msra.mxu0 0
    %672 = vmatprep.subr.bf16.mxu0 0
    %673 = vmatpush1.bf16.msra.mxu0 0
    %674 = vmatprep.subr.bf16.mxu0 0
    %675 = vmatpush1.bf16.msra.mxu0 0
    %676 = vmatprep.subr.bf16.mxu0 0
    %677 = vmatpush1.bf16.msra.mxu0 0
    %678 = vmatprep.subr.bf16.mxu0 0
    %679 = vmatpush1.bf16.msra.mxu0 0
    %680 = vmatprep.subr.bf16.mxu0 0
    %681 = vmatpush1.bf16.msra.mxu0 0
    %682 = vmatprep.subr.bf16.mxu0 0
    %683 = vmatpush1.bf16.msra.mxu0 0
    %684 = vmatprep.subr.bf16.mxu0 0
    %685 = vmatpush1.bf16.msra.mxu0 0
    %686 = vmatprep.subr.bf16.mxu0 0
    %687 = vmatpush1.bf16.msra.mxu0 0
    %688 = vmatprep.mubr.bf16.mxu0 0
    %689 = vmatmul.mubr.bf16.gmra.mrb[0].mxu0 %v654
    %v690 = vpop.f32.mrb[0].mxu0
    %v691 = vadd.f32 0.0, %v690
    %v692 = vpop.f32.mrb[0].mxu0
    %v693 = vpop.f32.mrb[0].mxu0
    %v694 = vadd.f32 0.0, %v693
    %v695 = vpop.f32.mrb[0].mxu0
    %696 = vdwg.mxu0
    %v697 = vlaneseq
    %v698 = vshrl.u32 %v697, 7
    %v699 = vsub.s32 3, %v698
    %v700 = vrot.slane %v313, %v699
    %v701 = vmul.f32 %v691, %v700
    %v702 = vmul.f32 %v694, %v700
    %v703 = vadd.f32 %v606, %v701
    %v704 = vadd.f32 %v607, %v702
    %v705 = vld [vmem:[%s6] sm:$0x1]
    %v707 = vlaneseq
    %v708 = vshrl.u32 %v707, 7
    %v709 = vsub.s32 0, %v708
    %v710 = vrot.slane %v705, %v709
    %v712 = vadd.f32 %v703, %v710
    %v713 = vadd.f32 %v704, %v710
    %v714 = vld [vmem:[%s7] sm:$0x1]
    %v716 = vlaneseq
    %v717 = vshrl.u32 %v716, 7
    %v718 = vsub.s32 0, %v717
    %v719 = vrot.slane %v714, %v718
    %v721 = vmul.f32 %v712, %v719
    %v722 = vmul.f32 %v713, %v719
    %v723 = vld [vmem:[%s8] sm:$0x1]
    %v725 = vlaneseq
    %v726 = vshrl.u32 %v725, 7
    %v727 = vsub.s32 0, %v726
    %v728 = vrot.slane %v723, %v727
    %v730 = vadd.f32 %v721, %v728
    %v731 = vadd.f32 %v722, %v728
    %vm732 = vcmp.gt.f32.partialorder %v730, 0.0
    %vm733 = vcmp.gt.f32.partialorder %v731, 0.0
    %v734 = vmin.f32 %v730, 0.0
    %v735 = vmin.f32 %v731, 0.0
    %v736 = vmul.f32 %v734, 1.442695
    %v737 = vpow.pop %v736
    %v738 = vmul.f32 %v735, 1.442695
    %v739 = vpow.pop %v738
    %v740 = vsub.f32 %v737, 1.0
    %v741 = vsub.f32 %v739, 1.0
    %v742 = vsel %vm732, %v730, %v740
    %v743 = vsel %vm733, %v731, %v741
    %744 = vst.msk [vmem:[#allocation2] sm:$0xff] %vm140, %v742
    %745 = vst.msk [vmem:[#allocation2 + $0x8] sm:$0xff] %vm140, %v743
    // Predicated region
    $region42: #{tpu_custom_call.1} parent=1 // pred_check
      _
    $region43: #{tpu_custom_call.1} parent=1 // pred_check_branch
      %747 = sbr.rel (0) target = $region45
    $region44: #{tpu_custom_call.1} parent=1 // pred_region
      %s749 = ssub.s32 256, 256
      %750 = vsyncadd [#allocation3], %s749
      %s751 = sshll.u32 [#allocation2], 4
      %s752 = int_to_ptr.vmem [resolvable:$true] %s751
      %757 = dma.vmem_to_hbm [thread:$0]  %s752, 256, %s10, [#allocation3], 128, 128, 8
    $region45: #{tpu_custom_call.1} parent=1 // pred_fallthru
      _
    // Predicated region
    $region46: #{tpu_custom_call.1} parent=1 // pred_check
      _
    $region47: #{tpu_custom_call.1} parent=1 // pred_check_branch
      %759 = sbr.rel (0) target = $region49
    $region48: #{tpu_custom_call.1} parent=1 // pred_region
      %760 = dma.done [#allocation3], 256
    $region49: #{tpu_custom_call.1} parent=1 // pred_fallthru
      _
    %761 = vsyncpa [#allocation3], 1

</llo_original>
